<compile_context>
chip_gen: v7x
topology: tpu7x:2x2x1
jax: 0.10.0
libtpu: 0.0.40
codegen_flags: <defaults>
</compile_context>

<pallas_src>
import math

import numpy as np

import jax
import jax.numpy as jnp
from jax.experimental import pallas as pl
from jax.experimental.pallas import tpu as pltpu

_BN_EPS = 1e-5
_SMALL_ROWS = 256      # below this many GEMM rows, plain XLA beats a kernel launch
_LANE = 128
_SUBLANE = 8
_VMEM_CACHE = [None]


def _round_up(x, m):
    return (x + m - 1) // m * m


def _vmem_limit_bytes():
    if _VMEM_CACHE[0] is None:
        try:
            cap = int(pltpu.get_tpu_info().vmem_capacity_bytes)
        except Exception:
            cap = 64 * 1024 * 1024                       # conservative (v7x per-TC)
        lim = min(max(cap - 16 * 1024 * 1024, 32 * 1024 * 1024), 100 * 1024 * 1024)
        _VMEM_CACHE[0] = int(lim)
    return _VMEM_CACHE[0]


def _compiler_params(sem):
    return pltpu.CompilerParams(dimension_semantics=sem,
                                vmem_limit_bytes=_vmem_limit_bytes())


# ----------------------------------------------------------------------------
# Kernel 1: fused (x @ W) * scale + bias [+ ReLU]   (1x1 conv + folded BN + ReLU)
# bf16 inputs, f32 accumulate, lane-dense (Cout padded to 128) f32 output.
# ----------------------------------------------------------------------------
def _matmul_affine_kernel(apply_relu):
    def kernel(x_ref, w_ref, s_ref, b_ref, o_ref):
        acc = jnp.dot(x_ref[...], w_ref[...], preferred_element_type=jnp.float32)
        acc = acc * s_ref[...] + b_ref[...]
        if apply_relu:
            acc = jnp.maximum(acc, 0.0)          # relu(relu(x)) == relu(x)
        o_ref[...] = acc.astype(o_ref.dtype)
    return kernel


def _affine_matmul(x2d, w, scale, bias, apply_relu, tm=1024):
    M, Cin = x2d.shape
    Cout = w.shape[1]
    Cout_p = _round_up(Cout, _LANE)              # lane-dense output stores
    if Cout_p != Cout:
        w = jnp.pad(w, ((0, 0), (0, Cout_p - Cout)))
        scale = jnp.pad(scale, ((0, 0), (0, Cout_p - Cout)))
        bias = jnp.pad(bias, ((0, 0), (0, Cout_p - Cout)))
    TM = min(tm, _round_up(M, _SUBLANE))
    Mp = _round_up(M, TM)
    if Mp != M:
        x2d = jnp.pad(x2d, ((0, Mp - M), (0, 0)))
    xb = x2d.astype(jnp.bfloat16)
    wb = w.astype(jnp.bfloat16)
    out = pl.pallas_call(
        _matmul_affine_kernel(apply_relu),
        out_shape=jax.ShapeDtypeStruct((Mp, Cout_p), jnp.float32),
        grid=(Mp // TM,),
        in_specs=[pl.BlockSpec((TM, Cin), lambda i: (i, 0)),
                  pl.BlockSpec((Cin, Cout_p), lambda i: (0, 0)),   # resident weight
                  pl.BlockSpec((1, Cout_p), lambda i: (0, 0)),
                  pl.BlockSpec((1, Cout_p), lambda i: (0, 0))],
        out_specs=pl.BlockSpec((TM, Cout_p), lambda i: (i, 0)),
        compiler_params=_compiler_params(("parallel",)),
    )(xb, wb, scale.astype(jnp.float32), bias.astype(jnp.float32))
    return out[:M, :Cout]


def _conv1x1_jnp(x2d, w, scale, bias, apply_relu):
    y = jnp.dot(x2d.astype(jnp.bfloat16), w.astype(jnp.bfloat16),
                preferred_element_type=jnp.float32)
    y = y * scale + bias
    return jnp.maximum(y, 0.0) if apply_relu else y


def conv_module_1x1(x_bhwc, p):
    B, H, W, Cin = x_bhwc.shape
    Cout = p["w"].shape[-1]
    x2d = x_bhwc.reshape(B * H * W, Cin)
    if B * H * W < _SMALL_ROWS:                  # tiny (PPM pooled maps): plain XLA
        y = _conv1x1_jnp(x2d, p["w"], p["scale"], p["bias"], True)
    else:
        y = _affine_matmul(x2d, p["w"], p["scale"], p["bias"], True)
    return y.reshape(B, H, W, Cout)


def conv_seg_1x1(x_bhwc, w, b):
    B, H, W, Cin = x_bhwc.shape
    Cout = w.shape[-1]
    scale = jnp.ones((1, Cout), jnp.float32)
    bias = b.reshape(1, Cout).astype(jnp.float32)
    x2d = x_bhwc.reshape(B * H * W, Cin)
    if B * H * W < _SMALL_ROWS:
        y = _conv1x1_jnp(x2d, w, scale, bias, False)
    else:
        y = _affine_matmul(x2d, w, scale, bias, False)
    return y.reshape(B, H, W, Cout)


# ----------------------------------------------------------------------------
# Kernel 2: fused 3x3 conv (pad=1) + folded BN + ReLU, row-banded, multi-source.
# grid = (B, H/TH); each step computes TH output rows.  The band's TH rows come
# from one TH-row BlockSpec (read exactly once), the +/-1 halo rows from two
# single-row BlockSpecs.  Multiple input sources (the un-materialized channel
# concat) each contribute 9 accumulated MXU taps with their own weight chunk.
# ----------------------------------------------------------------------------
def _conv3x3_kernel(nsrc, TH, W, Cout_p):
    def kernel(*refs):
        o_ref = refs[-1]
        s_ref = refs[4 * nsrc]
        b_ref = refs[4 * nsrc + 1]
        h = pl.program_id(1)
        acc = None
        for s in range(nsrc):
            mid = refs[3 * s][0]                   # (TH, W+2, Cin)   rows h*TH..+TH-1
            top = refs[3 * s + 1][0]               # (1,  W+2, Cin)   row h*TH-1 (clamped)
            bot = refs[3 * s + 2][0]               # (1,  W+2, Cin)   row h*TH+TH (zero pad)
            top = jnp.where(h > 0, top, jnp.zeros_like(top))   # top edge -> zeros
            w_ref = refs[3 * nsrc + s]             # (9, Cin, Cout_p) bf16
            band = jnp.concatenate([top, mid, bot], axis=0)    # (TH+2, W+2, Cin)
            for dy in range(3):
                for dx in range(3):
                    slab = band[dy:dy + TH, dx:dx + W, :]
                    slab = slab.reshape(TH * W, slab.shape[-1])
                    term = jnp.dot(slab, w_ref[dy * 3 + dx],
                                   preferred_element_type=jnp.float32)
                    acc = term if acc is None else acc + term
        acc = acc * s_ref[...] + b_ref[...]
        acc = jnp.maximum(acc, 0.0)                 # relu(relu(x)) == relu(x)
        o_ref[0] = acc.reshape(TH, W, Cout_p)
    return kernel


def _pick_row_band(H, W):
    # target ~512 matmul rows per step (fills the MXU, amortizes ~0.35us/step)
    return max(1, min(H, 512 // max(W, 1)))


def _conv3x3_jnp(x, w, scale, bias):
    B, H, W, _ = x.shape
    xp = jnp.pad(x.astype(jnp.bfloat16), ((0, 0), (1, 1), (1, 1), (0, 0)))
    wb = w.astype(jnp.bfloat16)
    acc = None
    for k in range(9):
        dy, dx = divmod(k, 3)
        patch = xp[:, dy:dy + H, dx:dx + W, :]
        term = jnp.einsum("bhwc,co->bhwo", patch, wb[k],
                          preferred_element_type=jnp.float32)
        acc = term if acc is None else acc + term
    acc = acc * scale.reshape(1, 1, 1, -1) + bias.reshape(1, 1, 1, -1)
    return jnp.maximum(acc, 0.0)


def conv_module_3x3(sources, p):
    if not isinstance(sources, (list, tuple)):
        sources = [sources]
    sources = list(sources)
    B, H, W, _ = sources[0].shape
    cins = [int(s.shape[-1]) for s in sources]
    w, scale, bias = p["w"], p["scale"], p["bias"]
    Cout = w.shape[-1]

    if B * H * W < _SMALL_ROWS:                    # tiny spatial map: plain XLA
        x = sources[0] if len(sources) == 1 else jnp.concatenate(sources, axis=-1)
        return _conv3x3_jnp(x, w, scale, bias)

    Cout_p = _round_up(Cout, _LANE)
    if Cout_p != Cout:
        w = jnp.pad(w, ((0, 0), (0, 0), (0, Cout_p - Cout)))
        scale = jnp.pad(scale, ((0, 0), (0, Cout_p - Cout)))
        bias = jnp.pad(bias, ((0, 0), (0, Cout_p - Cout)))

    offs = [0]
    for c in cins:
        offs.append(offs[-1] + c)
    # TODO(synk): for embed_dim >= 512 on v7x (64 MiB VMEM) the per-source weight
    # chunks should additionally be Cin-tiled (extra "arbitrary" grid axis + f32
    # accumulator scratch) or single-buffered.
    w_chunks = [w[:, offs[i]:offs[i + 1], :].astype(jnp.bfloat16)
                for i in range(len(sources))]

    TH = _pick_row_band(H, W)
    Hp = _round_up(H, TH)
    Hb = Hp // TH
    Wp2 = W + 2
    nsrc = len(sources)

    # Pad W by 1 on each side; pad H with (Hp-H)+TH zero rows at the bottom so
    # the bottom halo row and any partial band read zeros.  No top pad: the top
    # halo row is the clamped row (h*TH - 1), masked to zero for the first band.
    xws = [jnp.pad(s.astype(jnp.bfloat16),
                   ((0, 0), (0, Hp - H + TH), (1, 1), (0, 0)))
           for s in sources]

    in_specs, args = [], []
    for i in range(nsrc):
        cin = cins[i]
        in_specs += [
            pl.BlockSpec((1, TH, Wp2, cin), lambda b, h: (b, h, 0, 0)),
            pl.BlockSpec((1, 1, Wp2, cin),
                         lambda b, h: (b, jnp.maximum(h * TH - 1, 0), 0, 0)),
            pl.BlockSpec((1, 1, Wp2, cin),
                         lambda b, h: (b, h * TH + TH, 0, 0)),
        ]
        args += [xws[i], xws[i], xws[i]]
    for i in range(nsrc):
        in_specs.append(pl.BlockSpec((9, cins[i], Cout_p), lambda b, h: (0, 0, 0)))
        args.append(w_chunks[i])
    in_specs += [pl.BlockSpec((1, Cout_p), lambda b, h: (0, 0)),
                 pl.BlockSpec((1, Cout_p), lambda b, h: (0, 0))]
    args += [scale.astype(jnp.float32), bias.astype(jnp.float32)]

    out = pl.pallas_call(
        _conv3x3_kernel(nsrc, TH, W, Cout_p),
        out_shape=jax.ShapeDtypeStruct((B, Hp, W, Cout_p), jnp.float32),
        grid=(B, Hb),
        in_specs=in_specs,
        out_specs=pl.BlockSpec((1, TH, W, Cout_p), lambda b, h: (b, h, 0, 0)),
        compiler_params=_compiler_params(("parallel", "parallel")),
    )(*args)
    return out[:, :H, :, :Cout]


# ----------------------------------------------------------------------------
# Wrapper-level glue: bilinear resize / adaptive avg-pool as separable
# interpolation matrices (gather-style access, done in XLA).
# ----------------------------------------------------------------------------
def _bilinear_matrix(n_out, n_in, align_corners):
    m = np.zeros((n_out, n_in), dtype=np.float32)
    if n_in == 1:
        m[:, 0] = 1.0
        return jnp.asarray(m)
    for i in range(n_out):
        if align_corners:
            src = 0.0 if n_out == 1 else i * (n_in - 1) / (n_out - 1)
        else:
            src = (i + 0.5) * n_in / n_out - 0.5
            src = max(src, 0.0)
        src = min(src, float(n_in - 1))
        lo = min(int(math.floor(src)), n_in - 2)
        frac = src - lo
        m[i, lo] += 1.0 - frac
        m[i, lo + 1] += frac
    return jnp.asarray(m)          # rows sum to 1 -> commutes with the conv bias


def _adaptive_pool_matrix(n_out, n_in):
    m = np.zeros((n_out, n_in), dtype=np.float32)
    for i in range(n_out):
        s = (i * n_in) // n_out
        e = -((-(i + 1) * n_in) // n_out)          # ceil
        m[i, s:e] = 1.0 / (e - s)
    return jnp.asarray(m)


def bilinear_resize(x_bhwc, out_h, out_w, align_corners):
    _, H, W, _ = x_bhwc.shape
    if (out_h, out_w) == (H, W):
        return x_bhwc
    Rh = _bilinear_matrix(out_h, H, align_corners)
    Rw = _bilinear_matrix(out_w, W, align_corners)
    t = jnp.einsum("oh,bhwc->bowc", Rh, x_bhwc)
    return jnp.einsum("pw,bowc->bopc", Rw, t)


def adaptive_avg_pool2d(x_bhwc, out_h, out_w):
    _, H, W, _ = x_bhwc.shape
    Ph = _adaptive_pool_matrix(out_h, H)
    Pw = _adaptive_pool_matrix(out_w, W)
    t = jnp.einsum("oh,bhwc->bowc", Ph, x_bhwc)
    return jnp.einsum("pw,bowc->bopc", Pw, t)


# ----------------------------------------------------------------------------
# Parameters (BN folded into per-channel scale/bias at init time)
# ----------------------------------------------------------------------------
def _fold_bn(conv_b, gamma, beta, mean, var):
    inv = gamma / jnp.sqrt(var + _BN_EPS)
    scale = inv.reshape(1, -1)
    bias = ((conv_b - mean) * inv + beta).reshape(1, -1)
    return scale, bias


def _make_conv_module(key, cin, cout, ksize):
    kw, kb, kg, kbt, km, kv = jax.random.split(key, 6)
    s = 1.0 / math.sqrt(cin * ksize * ksize)
    if ksize == 1:
        w = jax.random.uniform(kw, (cin, cout), jnp.float32, -s, s)
    else:
        w = jax.random.uniform(kw, (ksize * ksize, cin, cout), jnp.float32, -s, s)
    b = jax.random.uniform(kb, (cout,), jnp.float32, -s, s)
    gamma = 1.0 + 0.1 * jax.random.normal(kg, (cout,), jnp.float32)
    beta = 0.1 * jax.random.normal(kbt, (cout,), jnp.float32)
    mean = 0.1 * jax.random.normal(km, (cout,), jnp.float32)
    var = 1.0 + 0.1 * jnp.abs(jax.random.normal(kv, (cout,), jnp.float32))
    scale, bias = _fold_bn(b, gamma, beta, mean, var)
    return {"w": w, "scale": scale, "bias": bias}


def init_uper_head_params(key, embed_dim, num_classes):
    keys = jax.random.split(key, 14)
    s = 1.0 / math.sqrt(embed_dim)
    return {
        "ppm": [_make_conv_module(keys[i], embed_dim, embed_dim, 1) for i in range(4)],
        "ppm_bottleneck": _make_conv_module(keys[4], embed_dim * 5, embed_dim, 3),
        "lateral": [_make_conv_module(keys[5 + i], embed_dim, embed_dim, 1) for i in range(3)],
        "fpn": [_make_conv_module(keys[8 + i], embed_dim, embed_dim, 3) for i in range(3)],
        "fpn_bottleneck": _make_conv_module(keys[11], embed_dim * 4, embed_dim, 3),
        "seg_w": jax.random.uniform(keys[12], (embed_dim, num_classes), jnp.float32, -s, s),
        "seg_b": jax.random.uniform(keys[13], (num_classes,), jnp.float32, -s, s),
    }


# ----------------------------------------------------------------------------
# UPerHead forward (inputs: list of 4 NCHW feature maps, same channel count)
# ----------------------------------------------------------------------------
def uper_head_forward(inputs_nchw, params):
    feats = [jnp.transpose(x, (0, 2, 3, 1)) for x in inputs_nchw]   # -> NHWC

    # --- PPM on the coarsest level (pooled-map convs are tiny -> plain XLA) ---
    top = feats[-1]
    _, Ht, Wt, _ = top.shape
    ppm_feats = [top]
    for idx, osz in enumerate((1, 2, 3, 6)):
        pmap = adaptive_avg_pool2d(top, osz, osz)
        pmap = conv_module_1x1(pmap, params["ppm"][idx])
        pmap = bilinear_resize(pmap, Ht, Wt, align_corners=False)
        ppm_feats.append(pmap)
    # channel concat is fused into the bottleneck kernel (per-source Cin chunks)
    psp = conv_module_3x3(ppm_feats, params["ppm_bottleneck"])      # -> C

    # --- laterals + top-down pathway ---
    laterals = [conv_module_1x1(feats[i], params["lateral"][i]) for i in range(3)]
    laterals.append(psp)
    for i in range(3, 0, -1):
        th, tw = laterals[i - 1].shape[1:3]
        laterals[i - 1] = laterals[i - 1] + bilinear_resize(
            laterals[i], th, tw, align_corners=False)

    # --- FPN convs + fused (concat-free) bottleneck ---
    fpn_outs = [conv_module_3x3(laterals[i], params["fpn"][i]) for i in range(3)]
    fpn_outs.append(laterals[3])
    h0, w0 = fpn_outs[0].shape[1:3]
    for i in range(3, 0, -1):
        fpn_outs[i] = bilinear_resize(fpn_outs[i], h0, w0, align_corners=False)
    out = conv_module_3x3(fpn_outs, params["fpn_bottleneck"])       # -> C

    # --- conv_seg commuted before the final 256x256 resize (both linear,
    #     bilinear rows sum to 1 so the bias commutes exactly).
    #     TODO(synk): Dropout2d(0.1) is stochastic at train time only; identity here.
    seg = conv_seg_1x1(out, params["seg_w"], params["seg_b"])       # at (h0, w0)
    seg = bilinear_resize(seg, 256, 256, align_corners=True)
    return jnp.transpose(seg, (0, 3, 1, 2))                         # -> NCHW


if __name__ == "__main__":
    key = jax.random.PRNGKey(0)
    B, C, num_classes = 2, 32, 8
    spatials = (16, 8, 4, 2)        # FPN pyramid, finest -> coarsest

    k_in, k_par, k_ms = jax.random.split(key, 3)
    in_keys = jax.random.split(k_in, len(spatials))
    inputs = [jax.random.normal(k, (B, C, s, s), jnp.float32)
              for k, s in zip(in_keys, spatials)]
    params = init_uper_head_params(k_par, C, num_classes)

    # --- sanity checks: Pallas kernels vs plain-XLA references ---
    x_nhwc = jnp.transpose(inputs[0], (0, 2, 3, 1))                 # (2,16,16,32)
    p1 = params["lateral"][0]
    ref1 = _conv1x1_jnp(x_nhwc.reshape(-1, C), p1["w"], p1["scale"], p1["bias"], True)
    got1 = conv_module_1x1(x_nhwc, p1).reshape(-1, C)
    err1 = float(jnp.max(jnp.abs(got1 - ref1)))

    p3 = params["fpn"][0]
    ref3 = _conv3x3_jnp(x_nhwc, p3["w"], p3["scale"], p3["bias"])
    got3 = conv_module_3x3(x_nhwc, p3)
    err3 = float(jnp.max(jnp.abs(got3 - ref3)))

    # multi-source (concat-free) bottleneck check
    srcs = [jax.random.normal(k, (B, 16, 16, C), jnp.float32)
            for k in jax.random.split(k_ms, 4)]
    pb = params["fpn_bottleneck"]
    refm = _conv3x3_jnp(jnp.concatenate(srcs, axis=-1), pb["w"], pb["scale"], pb["bias"])
    gotm = conv_module_3x3(srcs, pb)
    errm = float(jnp.max(jnp.abs(gotm - refm)))

    assert err1 < 2e-2 and err3 < 2e-2 and errm < 2e-2, (err1, err3, errm)

    out = jax.jit(uper_head_forward)(inputs, params)
    out = jax.block_until_ready(out)
    assert out.shape == (B, num_classes, 256, 256)
    assert out.dtype == jnp.float32
    assert bool(jnp.all(jnp.isfinite(out)))
    print("KERNEL_OK")
</pallas_src>

<mosaic_0001>
module attributes {stable_mosaic.version = 11 : i64} {
  func.func @kernel(%arg0: i32, %arg1: memref<512x32xbf16, #tpu.memory_space<vmem>>, %arg2: memref<32x128xbf16, #tpu.memory_space<vmem>>, %arg3: memref<1x128xf32, #tpu.memory_space<vmem>>, %arg4: memref<1x128xf32, #tpu.memory_space<vmem>>, %arg5: memref<512x128xf32, #tpu.memory_space<vmem>>) attributes {dimension_semantics = [#tpu.dimension_semantics<parallel>], iteration_bounds = array<i64: 1>, scalar_prefetch = 0 : i64, scratch_operands = 0 : i64, tpu.core_type = #tpu.core_type<tc>, window_params = [{transform_indices = @transform_0, window_bounds = array<i64: 512, 32>}, {pipeline_mode = #tpu.pipeline_mode<synchronous>, transform_indices = @transform_1, window_bounds = array<i64: 32, 128>}, {pipeline_mode = #tpu.pipeline_mode<synchronous>, transform_indices = @transform_2, window_bounds = array<i64: 1, 128>}, {pipeline_mode = #tpu.pipeline_mode<synchronous>, transform_indices = @transform_3, window_bounds = array<i64: 1, 128>}, {transform_indices = @transform_4, window_bounds = array<i64: 512, 128>}]} {
    %c0 = arith.constant 0 : index
    %c0_0 = arith.constant 0 : index
    %0 = vector.load %arg1[%c0, %c0_0] : memref<512x32xbf16, #tpu.memory_space<vmem>>, vector<512x32xbf16>
    %c0_1 = arith.constant 0 : index
    %c0_2 = arith.constant 0 : index
    %1 = vector.load %arg2[%c0_1, %c0_2] : memref<32x128xbf16, #tpu.memory_space<vmem>>, vector<32x128xbf16>
    %cst = arith.constant dense<0.000000e+00> : vector<512x128xf32>
    %2 = tpu.matmul %0, %1, %cst {dimension_numbers = #tpu.dot_dimension_numbers<[1], [0], [0], [1], [0, 0, 1, 1], [], []>} : vector<512x32xbf16>, vector<32x128xbf16>, vector<512x128xf32> -> vector<512x128xf32>
    %c0_3 = arith.constant 0 : index
    %c0_4 = arith.constant 0 : index
    %3 = vector.load %arg3[%c0_3, %c0_4] : memref<1x128xf32, #tpu.memory_space<vmem>>, vector<1x128xf32>
    %4 = vector.broadcast %3 : vector<1x128xf32> to vector<512x128xf32>
    %5 = arith.mulf %2, %4 : vector<512x128xf32>
    %c0_5 = arith.constant 0 : index
    %c0_6 = arith.constant 0 : index
    %6 = vector.load %arg4[%c0_5, %c0_6] : memref<1x128xf32, #tpu.memory_space<vmem>>, vector<1x128xf32>
    %7 = vector.broadcast %6 : vector<1x128xf32> to vector<512x128xf32>
    %8 = arith.addf %5, %7 : vector<512x128xf32>
    %cst_7 = arith.constant 0.000000e+00 : f32
    %9 = vector.broadcast %cst_7 : f32 to vector<512x128xf32>
    %10 = arith.maximumf %8, %9 : vector<512x128xf32>
    %c0_8 = arith.constant 0 : index
    %c0_9 = arith.constant 0 : index
    %11 = vector.load %arg5[%c0_8, %c0_9] : memref<512x128xf32, #tpu.memory_space<vmem>>, vector<512x128xf32>
    tpu.vector_store %arg5[%c0_8, %c0_9], %10 {strides = array<i32>} : memref<512x128xf32, #tpu.memory_space<vmem>>, vector<512x128xf32>,
    return
  }
  func.func @transform_0(%arg0: i32) -> (i32, i32) {
    %c0_i32 = arith.constant 0 : i32
    %c0_i32_0 = arith.constant 0 : i32
    return %arg0, %c0_i32 : i32, i32
  }
  func.func @transform_1(%arg0: i32) -> (i32, i32) {
    %c0_i32 = arith.constant 0 : i32
    %c0_i32_0 = arith.constant 0 : i32
    %c0_i32_1 = arith.constant 0 : i32
    return %c0_i32, %c0_i32_0 : i32, i32
  }
  func.func @transform_2(%arg0: i32) -> (i32, i32) {
    %c0_i32 = arith.constant 0 : i32
    %c0_i32_0 = arith.constant 0 : i32
    %c0_i32_1 = arith.constant 0 : i32
    return %c0_i32, %c0_i32_0 : i32, i32
  }
  func.func @transform_3(%arg0: i32) -> (i32, i32) {
    %c0_i32 = arith.constant 0 : i32
    %c0_i32_0 = arith.constant 0 : i32
    %c0_i32_1 = arith.constant 0 : i32
    return %c0_i32, %c0_i32_0 : i32, i32
  }
  func.func @transform_4(%arg0: i32) -> (i32, i32) {
    %c0_i32 = arith.constant 0 : i32
    %c0_i32_0 = arith.constant 0 : i32
    return %arg0, %c0_i32 : i32, i32
  }
}

</mosaic_0001>

<llo_original>
// kernel: tpu_custom_call.1
$region0: #{tpu_custom_call.1}
  #allocation0 [shape = 'u32[]', space=smem, size = 0x4, offset = 0x4, fixed_abs, tag = 'smem constant byte address 0x4 - core index']
  #allocation1 [shape = 'u32[144,128]{1,0:T(1,128)}', space=vmem, size = 0x12000, scoped, tag = 'internal scratch']
  %s0 = inlined_call_operand.vmem [shape: bf16[512,32], index: 0, kind: input, shape index: {}]
  %s1 = inlined_call_operand.vmem [shape: bf16[32,128], index: 1, kind: input, shape index: {}]
  %s2 = inlined_call_operand.vmem [shape: f32[1,128], index: 2, kind: input, shape index: {}]
  %s3 = inlined_call_operand.vmem [shape: f32[1,128], index: 3, kind: input, shape index: {}]
  %s4 = inlined_call_operand.hbm [shape: f32[512,128], index: 4, kind: output, shape index: {}]
  %s5 = sld [smem:[#allocation0]]
  $region26: #{tpu_custom_call.1} parent=0
    _
  %s7 = ssub.s32 1, %s5
  %s8 = scalar_select 0, %s7, %s5
  $region1: #{tpu_custom_call.1} parent=0
    #allocation2 [shape = 'u8[262144]{0}', space=vmem, size = 0x40000, scoped, tag = 'output window, operand 0, single buffered']
    #allocation3 [shape = 's32[1]{0}', space=sflag, size = 0x4, scoped, tag = 'scoped memory for tpu_custom_call.1']
    %9 = vsyncpa [#allocation3], 0
    // Predicated region
    $region2: #{tpu_custom_call.1} parent=1 // pred_check
      _
    $region3: #{tpu_custom_call.1} parent=1 // pred_check_branch
      %11 = sbr.rel (0) target = $region5
    $region4: #{tpu_custom_call.1} parent=1 // pred_region
      _
    $region5: #{tpu_custom_call.1} parent=1 // pred_fallthru
      _
    // Predicated region
    $region6: #{tpu_custom_call.1} parent=1 // pred_check
      _
    $region7: #{tpu_custom_call.1} parent=1 // pred_check_branch
      %13 = sbr.rel (0) target = $region9
    $region8: #{tpu_custom_call.1} parent=1 // pred_region
      _
    $region9: #{tpu_custom_call.1} parent=1 // pred_fallthru
      _
    // Predicated region
    $region10: #{tpu_custom_call.1} parent=1 // pred_check
      _
    $region11: #{tpu_custom_call.1} parent=1 // pred_check_branch
      %15 = sbr.rel (0) target = $region13
    $region12: #{tpu_custom_call.1} parent=1 // pred_region
      _
    $region13: #{tpu_custom_call.1} parent=1 // pred_fallthru
      _
    // Predicated region
    $region14: #{tpu_custom_call.1} parent=1 // pred_check
      _
    $region15: #{tpu_custom_call.1} parent=1 // pred_check_branch
      %17 = sbr.rel (0) target = $region17
    $region16: #{tpu_custom_call.1} parent=1 // pred_region
      _
    $region17: #{tpu_custom_call.1} parent=1 // pred_fallthru
      _
    %v19 = vld [vmem:[%s0] sm:$0xf]
    %v20 = vld [vmem:[%s0 + $0x4] sm:$0xf]
    %v21 = vld [vmem:[%s0 + $0x8] sm:$0xf]
    %v22 = vld [vmem:[%s0 + $0xc] sm:$0xf]
    %v23 = vld [vmem:[%s0 + $0x10] sm:$0xf]
    %v24 = vld [vmem:[%s0 + $0x14] sm:$0xf]
    %v25 = vld [vmem:[%s0 + $0x18] sm:$0xf]
    %v26 = vld [vmem:[%s0 + $0x1c] sm:$0xf]
    %v27 = vld [vmem:[%s0 + $0x20] sm:$0xf]
    %v28 = vld [vmem:[%s0 + $0x24] sm:$0xf]
    %v29 = vld [vmem:[%s0 + $0x28] sm:$0xf]
    %v30 = vld [vmem:[%s0 + $0x2c] sm:$0xf]
    %v31 = vld [vmem:[%s0 + $0x30] sm:$0xf]
    %v32 = vld [vmem:[%s0 + $0x34] sm:$0xf]
    %v33 = vld [vmem:[%s0 + $0x38] sm:$0xf]
    %v34 = vld [vmem:[%s0 + $0x3c] sm:$0xf]
    %v35 = vld [vmem:[%s0 + $0x40] sm:$0xf]
    %v36 = vld [vmem:[%s0 + $0x44] sm:$0xf]
    %v37 = vld [vmem:[%s0 + $0x48] sm:$0xf]
    %v38 = vld [vmem:[%s0 + $0x4c] sm:$0xf]
    %v39 = vld [vmem:[%s0 + $0x50] sm:$0xf]
    %v40 = vld [vmem:[%s0 + $0x54] sm:$0xf]
    %v41 = vld [vmem:[%s0 + $0x58] sm:$0xf]
    %v42 = vld [vmem:[%s0 + $0x5c] sm:$0xf]
    %v43 = vld [vmem:[%s0 + $0x60] sm:$0xf]
    %v44 = vld [vmem:[%s0 + $0x64] sm:$0xf]
    %v45 = vld [vmem:[%s0 + $0x68] sm:$0xf]
    %v46 = vld [vmem:[%s0 + $0x6c] sm:$0xf]
    %v47 = vld [vmem:[%s0 + $0x70] sm:$0xf]
    %v48 = vld [vmem:[%s0 + $0x74] sm:$0xf]
    %v49 = vld [vmem:[%s0 + $0x78] sm:$0xf]
    %v50 = vld [vmem:[%s0 + $0x7c] sm:$0xf]
    %v51 = vld [vmem:[%s0 + $0x80] sm:$0xf]
    %v52 = vld [vmem:[%s0 + $0x84] sm:$0xf]
    %v53 = vld [vmem:[%s0 + $0x88] sm:$0xf]
    %v54 = vld [vmem:[%s0 + $0x8c] sm:$0xf]
    %v55 = vld [vmem:[%s0 + $0x90] sm:$0xf]
    %v56 = vld [vmem:[%s0 + $0x94] sm:$0xf]
    %v57 = vld [vmem:[%s0 + $0x98] sm:$0xf]
    %v58 = vld [vmem:[%s0 + $0x9c] sm:$0xf]
    %v59 = vld [vmem:[%s0 + $0xa0] sm:$0xf]
    %v60 = vld [vmem:[%s0 + $0xa4] sm:$0xf]
    %v61 = vld [vmem:[%s0 + $0xa8] sm:$0xf]
    %v62 = vld [vmem:[%s0 + $0xac] sm:$0xf]
    %v63 = vld [vmem:[%s0 + $0xb0] sm:$0xf]
    %v64 = vld [vmem:[%s0 + $0xb4] sm:$0xf]
    %v65 = vld [vmem:[%s0 + $0xb8] sm:$0xf]
    %v66 = vld [vmem:[%s0 + $0xbc] sm:$0xf]
    %v67 = vld [vmem:[%s0 + $0xc0] sm:$0xf]
    %v68 = vld [vmem:[%s0 + $0xc4] sm:$0xf]
    %v69 = vld [vmem:[%s0 + $0xc8] sm:$0xf]
    %v70 = vld [vmem:[%s0 + $0xcc] sm:$0xf]
    %v71 = vld [vmem:[%s0 + $0xd0] sm:$0xf]
    %v72 = vld [vmem:[%s0 + $0xd4] sm:$0xf]
    %v73 = vld [vmem:[%s0 + $0xd8] sm:$0xf]
    %v74 = vld [vmem:[%s0 + $0xdc] sm:$0xf]
    %v75 = vld [vmem:[%s0 + $0xe0] sm:$0xf]
    %v76 = vld [vmem:[%s0 + $0xe4] sm:$0xf]
    %v77 = vld [vmem:[%s0 + $0xe8] sm:$0xf]
    %v78 = vld [vmem:[%s0 + $0xec] sm:$0xf]
    %v79 = vld [vmem:[%s0 + $0xf0] sm:$0xf]
    %v80 = vld [vmem:[%s0 + $0xf4] sm:$0xf]
    %v81 = vld [vmem:[%s0 + $0xf8] sm:$0xf]
    %v82 = vld [vmem:[%s0 + $0xfc] sm:$0xf]
    %v83 = vld [vmem:[%s1] sm:$0xf]
    %v84 = vld [vmem:[%s1 + $0x4] sm:$0xf]
    %v85 = vld [vmem:[%s1 + $0x8] sm:$0xf]
    %v86 = vld [vmem:[%s1 + $0xc] sm:$0xf]
    %v151 = vunpack.c.l.b16 %v19
    %v152 = vunpack.c.l.b16 %v20
    %v153 = vunpack.c.l.b16 %v21
    %v154 = vunpack.c.l.b16 %v22
    %v155 = vunpack.c.l.b16 %v23
    %v156 = vunpack.c.l.b16 %v24
    %v157 = vunpack.c.l.b16 %v25
    %v158 = vunpack.c.l.b16 %v26
    %v159 = vunpack.c.l.b16 %v27
    %v160 = vunpack.c.l.b16 %v28
    %v161 = vunpack.c.l.b16 %v29
    %v162 = vunpack.c.l.b16 %v30
    %v163 = vunpack.c.l.b16 %v31
    %v164 = vunpack.c.l.b16 %v32
    %v165 = vunpack.c.l.b16 %v33
    %v166 = vunpack.c.l.b16 %v34
    %v167 = vunpack.c.l.b16 %v35
    %v168 = vunpack.c.l.b16 %v36
    %v169 = vunpack.c.l.b16 %v37
    %v170 = vunpack.c.l.b16 %v38
    %v171 = vunpack.c.l.b16 %v39
    %v172 = vunpack.c.l.b16 %v40
    %v173 = vunpack.c.l.b16 %v41
    %v174 = vunpack.c.l.b16 %v42
    %v175 = vunpack.c.l.b16 %v43
    %v176 = vunpack.c.l.b16 %v44
    %v177 = vunpack.c.l.b16 %v45
    %v178 = vunpack.c.l.b16 %v46
    %v179 = vunpack.c.l.b16 %v47
    %v180 = vunpack.c.l.b16 %v48
    %v181 = vunpack.c.l.b16 %v49
    %v182 = vunpack.c.l.b16 %v50
    %v183 = vunpack.c.l.b16 %v51
    %v184 = vunpack.c.l.b16 %v52
    %v185 = vunpack.c.l.b16 %v53
    %v186 = vunpack.c.l.b16 %v54
    %v187 = vunpack.c.l.b16 %v55
    %v188 = vunpack.c.l.b16 %v56
    %v189 = vunpack.c.l.b16 %v57
    %v190 = vunpack.c.l.b16 %v58
    %v191 = vunpack.c.l.b16 %v59
    %v192 = vunpack.c.l.b16 %v60
    %v193 = vunpack.c.l.b16 %v61
    %v194 = vunpack.c.l.b16 %v62
    %v195 = vunpack.c.l.b16 %v63
    %v196 = vunpack.c.l.b16 %v64
    %v197 = vunpack.c.l.b16 %v65
    %v198 = vunpack.c.l.b16 %v66
    %v199 = vunpack.c.l.b16 %v67
    %v200 = vunpack.c.l.b16 %v68
    %v201 = vunpack.c.l.b16 %v69
    %v202 = vunpack.c.l.b16 %v70
    %v203 = vunpack.c.l.b16 %v71
    %v204 = vunpack.c.l.b16 %v72
    %v205 = vunpack.c.l.b16 %v73
    %v206 = vunpack.c.l.b16 %v74
    %v207 = vunpack.c.l.b16 %v75
    %v208 = vunpack.c.l.b16 %v76
    %v209 = vunpack.c.l.b16 %v77
    %v210 = vunpack.c.l.b16 %v78
    %v211 = vunpack.c.l.b16 %v79
    %v212 = vunpack.c.l.b16 %v80
    %v213 = vunpack.c.l.b16 %v81
    %v214 = vunpack.c.l.b16 %v82
    %v215 = vpack.c.b16 %v152, %v151
    %v216 = vpack.c.b16 %v154, %v153
    %v217 = vpack.c.b16 %v156, %v155
    %v218 = vpack.c.b16 %v158, %v157
    %v219 = vpack.c.b16 %v160, %v159
    %v220 = vpack.c.b16 %v162, %v161
    %v221 = vpack.c.b16 %v164, %v163
    %v222 = vpack.c.b16 %v166, %v165
    %v223 = vpack.c.b16 %v168, %v167
    %v224 = vpack.c.b16 %v170, %v169
    %v225 = vpack.c.b16 %v172, %v171
    %v226 = vpack.c.b16 %v174, %v173
    %v227 = vpack.c.b16 %v176, %v175
    %v228 = vpack.c.b16 %v178, %v177
    %v229 = vpack.c.b16 %v180, %v179
    %v230 = vpack.c.b16 %v182, %v181
    %v231 = vpack.c.b16 %v184, %v183
    %v232 = vpack.c.b16 %v186, %v185
    %v233 = vpack.c.b16 %v188, %v187
    %v234 = vpack.c.b16 %v190, %v189
    %v235 = vpack.c.b16 %v192, %v191
    %v236 = vpack.c.b16 %v194, %v193
    %v237 = vpack.c.b16 %v196, %v195
    %v238 = vpack.c.b16 %v198, %v197
    %v239 = vpack.c.b16 %v200, %v199
    %v240 = vpack.c.b16 %v202, %v201
    %v241 = vpack.c.b16 %v204, %v203
    %v242 = vpack.c.b16 %v206, %v205
    %v243 = vpack.c.b16 %v208, %v207
    %v244 = vpack.c.b16 %v210, %v209
    %v245 = vpack.c.b16 %v212, %v211
    %v246 = vpack.c.b16 %v214, %v213
    %v251 = vunpack.c.l.b16 %v83
    %v252 = vunpack.c.l.b16 %v84
    %v253 = vunpack.c.l.b16 %v85
    %v254 = vunpack.c.l.b16 %v86
    %v255 = vpack.c.b16 %v252, %v251
    %v256 = vpack.c.b16 %v254, %v253
    %vm259 = vcmask 261120
    %v261 = vsel %vm259, %v215, 0
    %v264 = vsel %vm259, %v216, 0
    %v267 = vsel %vm259, %v217, 0
    %v270 = vsel %vm259, %v218, 0
    %v273 = vsel %vm259, %v219, 0
    %v276 = vsel %vm259, %v220, 0
    %v279 = vsel %vm259, %v221, 0
    %v282 = vsel %vm259, %v222, 0
    %v285 = vsel %vm259, %v223, 0
    %v288 = vsel %vm259, %v224, 0
    %v291 = vsel %vm259, %v225, 0
    %v294 = vsel %vm259, %v226, 0
    %v297 = vsel %vm259, %v227, 0
    %v300 = vsel %vm259, %v228, 0
    %v303 = vsel %vm259, %v229, 0
    %v306 = vsel %vm259, %v230, 0
    %v309 = vsel %vm259, %v231, 0
    %v312 = vsel %vm259, %v232, 0
    %v315 = vsel %vm259, %v233, 0
    %v318 = vsel %vm259, %v234, 0
    %v321 = vsel %vm259, %v235, 0
    %v324 = vsel %vm259, %v236, 0
    %v327 = vsel %vm259, %v237, 0
    %v330 = vsel %vm259, %v238, 0
    %v333 = vsel %vm259, %v239, 0
    %v336 = vsel %vm259, %v240, 0
    %v339 = vsel %vm259, %v241, 0
    %v342 = vsel %vm259, %v242, 0
    %v345 = vsel %vm259, %v243, 0
    %v348 = vsel %vm259, %v244, 0
    %v351 = vsel %vm259, %v245, 0
    %v354 = vsel %vm259, %v246, 0
    %356 = vmatprep.subr.bf16.mxu0 0
    %357 = vmatpush1.bf16.msra.mxu0 %v255
    %358 = vmatprep.subr.bf16.mxu0 0
    %359 = vmatpush1.bf16.msra.mxu0 %v256
    %360 = vmatprep.subr.bf16.mxu0 0
    %361 = vmatpush1.bf16.msra.mxu0 0
    %362 = vmatprep.subr.bf16.mxu0 0
    %363 = vmatpush1.bf16.msra.mxu0 0
    %364 = vmatprep.subr.bf16.mxu0 0
    %365 = vmatpush1.bf16.msra.mxu0 0
    %366 = vmatprep.subr.bf16.mxu0 0
    %367 = vmatpush1.bf16.msra.mxu0 0
    %368 = vmatprep.subr.bf16.mxu0 0
    %369 = vmatpush1.bf16.msra.mxu0 0
    %370 = vmatprep.subr.bf16.mxu0 0
    %371 = vmatpush1.bf16.msra.mxu0 0
    %372 = vmatprep.subr.bf16.mxu0 0
    %373 = vmatpush1.bf16.msra.mxu0 0
    %374 = vmatprep.subr.bf16.mxu0 0
    %375 = vmatpush1.bf16.msra.mxu0 0
    %376 = vmatprep.subr.bf16.mxu0 0
    %377 = vmatpush1.bf16.msra.mxu0 0
    %378 = vmatprep.subr.bf16.mxu0 0
    %379 = vmatpush1.bf16.msra.mxu0 0
    %380 = vmatprep.subr.bf16.mxu0 0
    %381 = vmatpush1.bf16.msra.mxu0 0
    %382 = vmatprep.subr.bf16.mxu0 0
    %383 = vmatpush1.bf16.msra.mxu0 0
    %384 = vmatprep.subr.bf16.mxu0 0
    %385 = vmatpush1.bf16.msra.mxu0 0
    %386 = vmatprep.subr.bf16.mxu0 0
    %387 = vmatpush1.bf16.msra.mxu0 0
    %388 = vmatprep.mubr.bf16.mxu0 0
    %389 = vmatmul.mubr.bf16.gmra.mrb[0].mxu0 %v261
    %v390 = vpop.f32.mrb[0].mxu0
    %v391 = vadd.f32 0.0, %v390
    %v392 = vpop.f32.mrb[0].mxu0
    %v393 = vpop.f32.mrb[0].mxu0
    %v394 = vadd.f32 0.0, %v393
    %v395 = vpop.f32.mrb[0].mxu0
    %396 = vmatprep.mubr.bf16.mxu0 0
    %397 = vmatmul.mubr.bf16.gmra.mrb[0].mxu0 %v264
    %v398 = vpop.f32.mrb[0].mxu0
    %v399 = vadd.f32 0.0, %v398
    %v400 = vpop.f32.mrb[0].mxu0
    %v401 = vpop.f32.mrb[0].mxu0
    %v402 = vadd.f32 0.0, %v401
    %v403 = vpop.f32.mrb[0].mxu0
    %404 = vmatprep.mubr.bf16.mxu0 0
    %405 = vmatmul.mubr.bf16.gmra.mrb[0].mxu0 %v267
    %v406 = vpop.f32.mrb[0].mxu0
    %v407 = vadd.f32 0.0, %v406
    %v408 = vpop.f32.mrb[0].mxu0
    %v409 = vpop.f32.mrb[0].mxu0
    %v410 = vadd.f32 0.0, %v409
    %v411 = vpop.f32.mrb[0].mxu0
    %412 = vmatprep.mubr.bf16.mxu0 0
    %413 = vmatmul.mubr.bf16.gmra.mrb[0].mxu0 %v270
    %v414 = vpop.f32.mrb[0].mxu0
    %v415 = vadd.f32 0.0, %v414
    %v416 = vpop.f32.mrb[0].mxu0
    %v417 = vpop.f32.mrb[0].mxu0
    %v418 = vadd.f32 0.0, %v417
    %v419 = vpop.f32.mrb[0].mxu0
    %420 = vmatprep.mubr.bf16.mxu0 0
    %421 = vmatmul.mubr.bf16.gmra.mrb[0].mxu0 %v273
    %v422 = vpop.f32.mrb[0].mxu0
    %v423 = vadd.f32 0.0, %v422
    %v424 = vpop.f32.mrb[0].mxu0
    %v425 = vpop.f32.mrb[0].mxu0
    %v426 = vadd.f32 0.0, %v425
    %v427 = vpop.f32.mrb[0].mxu0
    %428 = vmatprep.mubr.bf16.mxu0 0
    %429 = vmatmul.mubr.bf16.gmra.mrb[0].mxu0 %v276
    %v430 = vpop.f32.mrb[0].mxu0
    %v431 = vadd.f32 0.0, %v430
    %v432 = vpop.f32.mrb[0].mxu0
    %v433 = vpop.f32.mrb[0].mxu0
    %v434 = vadd.f32 0.0, %v433
    %v435 = vpop.f32.mrb[0].mxu0
    %436 = vmatprep.mubr.bf16.mxu0 0
    %437 = vmatmul.mubr.bf16.gmra.mrb[0].mxu0 %v279
    %v438 = vpop.f32.mrb[0].mxu0
    %v439 = vadd.f32 0.0, %v438
    %v440 = vpop.f32.mrb[0].mxu0
    %v441 = vpop.f32.mrb[0].mxu0
    %v442 = vadd.f32 0.0, %v441
    %v443 = vpop.f32.mrb[0].mxu0
    %444 = vmatprep.mubr.bf16.mxu0 0
    %445 = vmatmul.mubr.bf16.gmra.mrb[0].mxu0 %v282
    %v446 = vpop.f32.mrb[0].mxu0
    %v447 = vadd.f32 0.0, %v446
    %v448 = vpop.f32.mrb[0].mxu0
    %v449 = vpop.f32.mrb[0].mxu0
    %v450 = vadd.f32 0.0, %v449
    %v451 = vpop.f32.mrb[0].mxu0
    %452 = vmatprep.mubr.bf16.mxu0 0
    %453 = vmatmul.mubr.bf16.gmra.mrb[0].mxu0 %v285
    %v454 = vpop.f32.mrb[0].mxu0
    %v455 = vadd.f32 0.0, %v454
    %v456 = vpop.f32.mrb[0].mxu0
    %v457 = vpop.f32.mrb[0].mxu0
    %v458 = vadd.f32 0.0, %v457
    %v459 = vpop.f32.mrb[0].mxu0
    %460 = vmatprep.mubr.bf16.mxu0 0
    %461 = vmatmul.mubr.bf16.gmra.mrb[0].mxu0 %v288
    %v462 = vpop.f32.mrb[0].mxu0
    %v463 = vadd.f32 0.0, %v462
    %v464 = vpop.f32.mrb[0].mxu0
    %v465 = vpop.f32.mrb[0].mxu0
    %v466 = vadd.f32 0.0, %v465
    %v467 = vpop.f32.mrb[0].mxu0
    %468 = vmatprep.mubr.bf16.mxu0 0
    %469 = vmatmul.mubr.bf16.gmra.mrb[0].mxu0 %v291
    %v470 = vpop.f32.mrb[0].mxu0
    %v471 = vadd.f32 0.0, %v470
    %v472 = vpop.f32.mrb[0].mxu0
    %v473 = vpop.f32.mrb[0].mxu0
    %v474 = vadd.f32 0.0, %v473
    %v475 = vpop.f32.mrb[0].mxu0
    %476 = vmatprep.mubr.bf16.mxu0 0
    %477 = vmatmul.mubr.bf16.gmra.mrb[0].mxu0 %v294
    %v478 = vpop.f32.mrb[0].mxu0
    %v479 = vadd.f32 0.0, %v478
    %v480 = vpop.f32.mrb[0].mxu0
    %v481 = vpop.f32.mrb[0].mxu0
    %v482 = vadd.f32 0.0, %v481
    %v483 = vpop.f32.mrb[0].mxu0
    %484 = vmatprep.mubr.bf16.mxu0 0
    %485 = vmatmul.mubr.bf16.gmra.mrb[0].mxu0 %v297
    %v486 = vpop.f32.mrb[0].mxu0
    %v487 = vadd.f32 0.0, %v486
    %v488 = vpop.f32.mrb[0].mxu0
    %v489 = vpop.f32.mrb[0].mxu0
    %v490 = vadd.f32 0.0, %v489
    %v491 = vpop.f32.mrb[0].mxu0
    %492 = vmatprep.mubr.bf16.mxu0 0
    %493 = vmatmul.mubr.bf16.gmra.mrb[0].mxu0 %v300
    %v494 = vpop.f32.mrb[0].mxu0
    %v495 = vadd.f32 0.0, %v494
    %v496 = vpop.f32.mrb[0].mxu0
    %v497 = vpop.f32.mrb[0].mxu0
    %v498 = vadd.f32 0.0, %v497
    %v499 = vpop.f32.mrb[0].mxu0
    %500 = vmatprep.mubr.bf16.mxu0 0
    %501 = vmatmul.mubr.bf16.gmra.mrb[0].mxu0 %v303
    %v502 = vpop.f32.mrb[0].mxu0
    %v503 = vadd.f32 0.0, %v502
    %v504 = vpop.f32.mrb[0].mxu0
    %v505 = vpop.f32.mrb[0].mxu0
    %v506 = vadd.f32 0.0, %v505
    %v507 = vpop.f32.mrb[0].mxu0
    %508 = vmatprep.mubr.bf16.mxu0 0
    %509 = vmatmul.mubr.bf16.gmra.mrb[0].mxu0 %v306
    %v510 = vpop.f32.mrb[0].mxu0
    %v511 = vadd.f32 0.0, %v510
    %v512 = vpop.f32.mrb[0].mxu0
    %v513 = vpop.f32.mrb[0].mxu0
    %v514 = vadd.f32 0.0, %v513
    %v515 = vpop.f32.mrb[0].mxu0
    %516 = vmatprep.mubr.bf16.mxu0 0
    %517 = vmatmul.mubr.bf16.gmra.mrb[0].mxu0 %v309
    %v518 = vpop.f32.mrb[0].mxu0
    %v519 = vadd.f32 0.0, %v518
    %v520 = vpop.f32.mrb[0].mxu0
    %v521 = vpop.f32.mrb[0].mxu0
    %v522 = vadd.f32 0.0, %v521
    %v523 = vpop.f32.mrb[0].mxu0
    %524 = vmatprep.mubr.bf16.mxu0 0
    %525 = vmatmul.mubr.bf16.gmra.mrb[0].mxu0 %v312
    %v526 = vpop.f32.mrb[0].mxu0
    %v527 = vadd.f32 0.0, %v526
    %v528 = vpop.f32.mrb[0].mxu0
    %v529 = vpop.f32.mrb[0].mxu0
    %v530 = vadd.f32 0.0, %v529
    %v531 = vpop.f32.mrb[0].mxu0
    %532 = vmatprep.mubr.bf16.mxu0 0
    %533 = vmatmul.mubr.bf16.gmra.mrb[0].mxu0 %v315
    %v534 = vpop.f32.mrb[0].mxu0
    %v535 = vadd.f32 0.0, %v534
    %v536 = vpop.f32.mrb[0].mxu0
    %v537 = vpop.f32.mrb[0].mxu0
    %v538 = vadd.f32 0.0, %v537
    %v539 = vpop.f32.mrb[0].mxu0
    %540 = vmatprep.mubr.bf16.mxu0 0
    %541 = vmatmul.mubr.bf16.gmra.mrb[0].mxu0 %v318
    %v542 = vpop.f32.mrb[0].mxu0
    %v543 = vadd.f32 0.0, %v542
    %v544 = vpop.f32.mrb[0].mxu0
    %v545 = vpop.f32.mrb[0].mxu0
    %v546 = vadd.f32 0.0, %v545
    %v547 = vpop.f32.mrb[0].mxu0
    %548 = vmatprep.mubr.bf16.mxu0 0
    %549 = vmatmul.mubr.bf16.gmra.mrb[0].mxu0 %v321
    %v550 = vpop.f32.mrb[0].mxu0
    %v551 = vadd.f32 0.0, %v550
    %v552 = vpop.f32.mrb[0].mxu0
    %v553 = vpop.f32.mrb[0].mxu0
    %v554 = vadd.f32 0.0, %v553
    %v555 = vpop.f32.mrb[0].mxu0
    %556 = vmatprep.mubr.bf16.mxu0 0
    %557 = vmatmul.mubr.bf16.gmra.mrb[0].mxu0 %v324
    %v558 = vpop.f32.mrb[0].mxu0
    %v559 = vadd.f32 0.0, %v558
    %v560 = vpop.f32.mrb[0].mxu0
    %v561 = vpop.f32.mrb[0].mxu0
    %v562 = vadd.f32 0.0, %v561
    %v563 = vpop.f32.mrb[0].mxu0
    %564 = vmatprep.mubr.bf16.mxu0 0
    %565 = vmatmul.mubr.bf16.gmra.mrb[0].mxu0 %v327
    %v566 = vpop.f32.mrb[0].mxu0
    %v567 = vadd.f32 0.0, %v566
    %v568 = vpop.f32.mrb[0].mxu0
    %v569 = vpop.f32.mrb[0].mxu0
    %v570 = vadd.f32 0.0, %v569
    %v571 = vpop.f32.mrb[0].mxu0
    %572 = vmatprep.mubr.bf16.mxu0 0
    %573 = vmatmul.mubr.bf16.gmra.mrb[0].mxu0 %v330
    %v574 = vpop.f32.mrb[0].mxu0
    %v575 = vadd.f32 0.0, %v574
    %v576 = vpop.f32.mrb[0].mxu0
    %v577 = vpop.f32.mrb[0].mxu0
    %v578 = vadd.f32 0.0, %v577
    %v579 = vpop.f32.mrb[0].mxu0
    %580 = vmatprep.mubr.bf16.mxu0 0
    %581 = vmatmul.mubr.bf16.gmra.mrb[0].mxu0 %v333
    %v582 = vpop.f32.mrb[0].mxu0
    %v583 = vadd.f32 0.0, %v582
    %v584 = vpop.f32.mrb[0].mxu0
    %v585 = vpop.f32.mrb[0].mxu0
    %v586 = vadd.f32 0.0, %v585
    %v587 = vpop.f32.mrb[0].mxu0
    %588 = vmatprep.mubr.bf16.mxu0 0
    %589 = vmatmul.mubr.bf16.gmra.mrb[0].mxu0 %v336
    %v590 = vpop.f32.mrb[0].mxu0
    %v591 = vadd.f32 0.0, %v590
    %v592 = vpop.f32.mrb[0].mxu0
    %v593 = vpop.f32.mrb[0].mxu0
    %v594 = vadd.f32 0.0, %v593
    %v595 = vpop.f32.mrb[0].mxu0
    %596 = vmatprep.mubr.bf16.mxu0 0
    %597 = vmatmul.mubr.bf16.gmra.mrb[0].mxu0 %v339
    %v598 = vpop.f32.mrb[0].mxu0
    %v599 = vadd.f32 0.0, %v598
    %v600 = vpop.f32.mrb[0].mxu0
    %v601 = vpop.f32.mrb[0].mxu0
    %v602 = vadd.f32 0.0, %v601
    %v603 = vpop.f32.mrb[0].mxu0
    %604 = vmatprep.mubr.bf16.mxu0 0
    %605 = vmatmul.mubr.bf16.gmra.mrb[0].mxu0 %v342
    %v606 = vpop.f32.mrb[0].mxu0
    %v607 = vadd.f32 0.0, %v606
    %v608 = vpop.f32.mrb[0].mxu0
    %v609 = vpop.f32.mrb[0].mxu0
    %v610 = vadd.f32 0.0, %v609
    %v611 = vpop.f32.mrb[0].mxu0
    %612 = vmatprep.mubr.bf16.mxu0 0
    %613 = vmatmul.mubr.bf16.gmra.mrb[0].mxu0 %v345
    %v614 = vpop.f32.mrb[0].mxu0
    %v615 = vadd.f32 0.0, %v614
    %v616 = vpop.f32.mrb[0].mxu0
    %v617 = vpop.f32.mrb[0].mxu0
    %v618 = vadd.f32 0.0, %v617
    %v619 = vpop.f32.mrb[0].mxu0
    %620 = vmatprep.mubr.bf16.mxu0 0
    %621 = vmatmul.mubr.bf16.gmra.mrb[0].mxu0 %v348
    %v622 = vpop.f32.mrb[0].mxu0
    %v623 = vadd.f32 0.0, %v622
    %v624 = vpop.f32.mrb[0].mxu0
    %v625 = vpop.f32.mrb[0].mxu0
    %v626 = vadd.f32 0.0, %v625
    %v627 = vpop.f32.mrb[0].mxu0
    %628 = vmatprep.mubr.bf16.mxu0 0
    %629 = vmatmul.mubr.bf16.gmra.mrb[0].mxu0 %v351
    %v630 = vpop.f32.mrb[0].mxu0
    %v631 = vadd.f32 0.0, %v630
    %v632 = vpop.f32.mrb[0].mxu0
    %v633 = vpop.f32.mrb[0].mxu0
    %v634 = vadd.f32 0.0, %v633
    %v635 = vpop.f32.mrb[0].mxu0
    %636 = vmatprep.mubr.bf16.mxu0 0
    %637 = vmatmul.mubr.bf16.gmra.mrb[0].mxu0 %v354
    %v638 = vpop.f32.mrb[0].mxu0
    %v639 = vadd.f32 0.0, %v638
    %v640 = vpop.f32.mrb[0].mxu0
    %v641 = vpop.f32.mrb[0].mxu0
    %v642 = vadd.f32 0.0, %v641
    %v643 = vpop.f32.mrb[0].mxu0
    %644 = vdwg.mxu0
    %v645 = vld [vmem:[%s2] sm:$0x1]
    %v647 = vlaneseq
    %v648 = vshrl.u32 %v647, 7
    %v649 = vsub.s32 0, %v648
    %v650 = vrot.slane %v645, %v649
    %v652 = vmul.f32 %v391, %v650
    %v653 = vmul.f32 %v394, %v650
    %v654 = vmul.f32 %v399, %v650
    %v655 = vmul.f32 %v402, %v650
    %v656 = vmul.f32 %v407, %v650
    %v657 = vmul.f32 %v410, %v650
    %v658 = vmul.f32 %v415, %v650
    %v659 = vmul.f32 %v418, %v650
    %v660 = vmul.f32 %v423, %v650
    %v661 = vmul.f32 %v426, %v650
    %v662 = vmul.f32 %v431, %v650
    %v663 = vmul.f32 %v434, %v650
    %v664 = vmul.f32 %v439, %v650
    %v665 = vmul.f32 %v442, %v650
    %v666 = vmul.f32 %v447, %v650
    %v667 = vmul.f32 %v450, %v650
    %v668 = vmul.f32 %v455, %v650
    %v669 = vmul.f32 %v458, %v650
    %v670 = vmul.f32 %v463, %v650
    %v671 = vmul.f32 %v466, %v650
    %v672 = vmul.f32 %v471, %v650
    %v673 = vmul.f32 %v474, %v650
    %v674 = vmul.f32 %v479, %v650
    %v675 = vmul.f32 %v482, %v650
    %v676 = vmul.f32 %v487, %v650
    %v677 = vmul.f32 %v490, %v650
    %v678 = vmul.f32 %v495, %v650
    %v679 = vmul.f32 %v498, %v650
    %v680 = vmul.f32 %v503, %v650
    %v681 = vmul.f32 %v506, %v650
    %v682 = vmul.f32 %v511, %v650
    %v683 = vmul.f32 %v514, %v650
    %v684 = vmul.f32 %v519, %v650
    %v685 = vmul.f32 %v522, %v650
    %v686 = vmul.f32 %v527, %v650
    %v687 = vmul.f32 %v530, %v650
    %v688 = vmul.f32 %v535, %v650
    %v689 = vmul.f32 %v538, %v650
    %v690 = vmul.f32 %v543, %v650
    %v691 = vmul.f32 %v546, %v650
    %v692 = vmul.f32 %v551, %v650
    %v693 = vmul.f32 %v554, %v650
    %v694 = vmul.f32 %v559, %v650
    %v695 = vmul.f32 %v562, %v650
    %v696 = vmul.f32 %v567, %v650
    %v697 = vmul.f32 %v570, %v650
    %v698 = vmul.f32 %v575, %v650
    %v699 = vmul.f32 %v578, %v650
    %v700 = vmul.f32 %v583, %v650
    %v701 = vmul.f32 %v586, %v650
    %v702 = vmul.f32 %v591, %v650
    %v703 = vmul.f32 %v594, %v650
    %v704 = vmul.f32 %v599, %v650
    %v705 = vmul.f32 %v602, %v650
    %v706 = vmul.f32 %v607, %v650
    %v707 = vmul.f32 %v610, %v650
    %v708 = vmul.f32 %v615, %v650
    %v709 = vmul.f32 %v618, %v650
    %v710 = vmul.f32 %v623, %v650
    %v711 = vmul.f32 %v626, %v650
    %v712 = vmul.f32 %v631, %v650
    %v713 = vmul.f32 %v634, %v650
    %v714 = vmul.f32 %v639, %v650
    %v715 = vmul.f32 %v642, %v650
    %v716 = vld [vmem:[%s3] sm:$0x1]
    %v718 = vlaneseq
    %v719 = vshrl.u32 %v718, 7
    %v720 = vsub.s32 0, %v719
    %v721 = vrot.slane %v716, %v720
    %v723 = vadd.f32 %v652, %v721
    %v724 = vadd.f32 %v653, %v721
    %v725 = vadd.f32 %v654, %v721
    %v726 = vadd.f32 %v655, %v721
    %v727 = vadd.f32 %v656, %v721
    %v728 = vadd.f32 %v657, %v721
    %v729 = vadd.f32 %v658, %v721
    %v730 = vadd.f32 %v659, %v721
    %v731 = vadd.f32 %v660, %v721
    %v732 = vadd.f32 %v661, %v721
    %v733 = vadd.f32 %v662, %v721
    %v734 = vadd.f32 %v663, %v721
    %v735 = vadd.f32 %v664, %v721
    %v736 = vadd.f32 %v665, %v721
    %v737 = vadd.f32 %v666, %v721
    %v738 = vadd.f32 %v667, %v721
    %v739 = vadd.f32 %v668, %v721
    %v740 = vadd.f32 %v669, %v721
    %v741 = vadd.f32 %v670, %v721
    %v742 = vadd.f32 %v671, %v721
    %v743 = vadd.f32 %v672, %v721
    %v744 = vadd.f32 %v673, %v721
    %v745 = vadd.f32 %v674, %v721
    %v746 = vadd.f32 %v675, %v721
    %v747 = vadd.f32 %v676, %v721
    %v748 = vadd.f32 %v677, %v721
    %v749 = vadd.f32 %v678, %v721
    %v750 = vadd.f32 %v679, %v721
    %v751 = vadd.f32 %v680, %v721
    %v752 = vadd.f32 %v681, %v721
    %v753 = vadd.f32 %v682, %v721
    %v754 = vadd.f32 %v683, %v721
    %v755 = vadd.f32 %v684, %v721
    %v756 = vadd.f32 %v685, %v721
    %v757 = vadd.f32 %v686, %v721
    %v758 = vadd.f32 %v687, %v721
    %v759 = vadd.f32 %v688, %v721
    %v760 = vadd.f32 %v689, %v721
    %v761 = vadd.f32 %v690, %v721
    %v762 = vadd.f32 %v691, %v721
    %v763 = vadd.f32 %v692, %v721
    %v764 = vadd.f32 %v693, %v721
    %v765 = vadd.f32 %v694, %v721
    %v766 = vadd.f32 %v695, %v721
    %v767 = vadd.f32 %v696, %v721
    %v768 = vadd.f32 %v697, %v721
    %v769 = vadd.f32 %v698, %v721
    %v770 = vadd.f32 %v699, %v721
    %v771 = vadd.f32 %v700, %v721
    %v772 = vadd.f32 %v701, %v721
    %v773 = vadd.f32 %v702, %v721
    %v774 = vadd.f32 %v703, %v721
    %v775 = vadd.f32 %v704, %v721
    %v776 = vadd.f32 %v705, %v721
    %v777 = vadd.f32 %v706, %v721
    %v778 = vadd.f32 %v707, %v721
    %v779 = vadd.f32 %v708, %v721
    %v780 = vadd.f32 %v709, %v721
    %v781 = vadd.f32 %v710, %v721
    %v782 = vadd.f32 %v711, %v721
    %v783 = vadd.f32 %v712, %v721
    %v784 = vadd.f32 %v713, %v721
    %v785 = vadd.f32 %v714, %v721
    %v786 = vadd.f32 %v715, %v721
    %v787 = vmax.f32 %v723, 0.0
    %v788 = vmax.f32 %v724, 0.0
    %v789 = vmax.f32 %v725, 0.0
    %v790 = vmax.f32 %v726, 0.0
    %v791 = vmax.f32 %v727, 0.0
    %v792 = vmax.f32 %v728, 0.0
    %v793 = vmax.f32 %v729, 0.0
    %v794 = vmax.f32 %v730, 0.0
    %v795 = vmax.f32 %v731, 0.0
    %v796 = vmax.f32 %v732, 0.0
    %v797 = vmax.f32 %v733, 0.0
    %v798 = vmax.f32 %v734, 0.0
    %v799 = vmax.f32 %v735, 0.0
    %v800 = vmax.f32 %v736, 0.0
    %v801 = vmax.f32 %v737, 0.0
    %v802 = vmax.f32 %v738, 0.0
    %v803 = vmax.f32 %v739, 0.0
    %v804 = vmax.f32 %v740, 0.0
    %v805 = vmax.f32 %v741, 0.0
    %v806 = vmax.f32 %v742, 0.0
    %v807 = vmax.f32 %v743, 0.0
    %v808 = vmax.f32 %v744, 0.0
    %v809 = vmax.f32 %v745, 0.0
    %v810 = vmax.f32 %v746, 0.0
    %v811 = vmax.f32 %v747, 0.0
    %v812 = vmax.f32 %v748, 0.0
    %v813 = vmax.f32 %v749, 0.0
    %v814 = vmax.f32 %v750, 0.0
    %v815 = vmax.f32 %v751, 0.0
    %v816 = vmax.f32 %v752, 0.0
    %v817 = vmax.f32 %v753, 0.0
    %v818 = vmax.f32 %v754, 0.0
    %v819 = vmax.f32 %v755, 0.0
    %v820 = vmax.f32 %v756, 0.0
    %v821 = vmax.f32 %v757, 0.0
    %v822 = vmax.f32 %v758, 0.0
    %v823 = vmax.f32 %v759, 0.0
    %v824 = vmax.f32 %v760, 0.0
    %v825 = vmax.f32 %v761, 0.0
    %v826 = vmax.f32 %v762, 0.0
    %v827 = vmax.f32 %v763, 0.0
    %v828 = vmax.f32 %v764, 0.0
    %v829 = vmax.f32 %v765, 0.0
    %v830 = vmax.f32 %v766, 0.0
    %v831 = vmax.f32 %v767, 0.0
    %v832 = vmax.f32 %v768, 0.0
    %v833 = vmax.f32 %v769, 0.0
    %v834 = vmax.f32 %v770, 0.0
    %v835 = vmax.f32 %v771, 0.0
    %v836 = vmax.f32 %v772, 0.0
    %v837 = vmax.f32 %v773, 0.0
    %v838 = vmax.f32 %v774, 0.0
    %v839 = vmax.f32 %v775, 0.0
    %v840 = vmax.f32 %v776, 0.0
    %v841 = vmax.f32 %v777, 0.0
    %v842 = vmax.f32 %v778, 0.0
    %v843 = vmax.f32 %v779, 0.0
    %v844 = vmax.f32 %v780, 0.0
    %v845 = vmax.f32 %v781, 0.0
    %v846 = vmax.f32 %v782, 0.0
    %v847 = vmax.f32 %v783, 0.0
    %v848 = vmax.f32 %v784, 0.0
    %v849 = vmax.f32 %v785, 0.0
    %v850 = vmax.f32 %v786, 0.0
    %851 = vst [vmem:[#allocation2] sm:$0xff] %v787
    %852 = vst [vmem:[#allocation2 + $0x8] sm:$0xff] %v788
    %853 = vst [vmem:[#allocation2 + $0x10] sm:$0xff] %v789
    %854 = vst [vmem:[#allocation2 + $0x18] sm:$0xff] %v790
    %855 = vst [vmem:[#allocation2 + $0x20] sm:$0xff] %v791
    %856 = vst [vmem:[#allocation2 + $0x28] sm:$0xff] %v792
    %857 = vst [vmem:[#allocation2 + $0x30] sm:$0xff] %v793
    %858 = vst [vmem:[#allocation2 + $0x38] sm:$0xff] %v794
    %859 = vst [vmem:[#allocation2 + $0x40] sm:$0xff] %v795
    %860 = vst [vmem:[#allocation2 + $0x48] sm:$0xff] %v796
    %861 = vst [vmem:[#allocation2 + $0x50] sm:$0xff] %v797
    %862 = vst [vmem:[#allocation2 + $0x58] sm:$0xff] %v798
    %863 = vst [vmem:[#allocation2 + $0x60] sm:$0xff] %v799
    %864 = vst [vmem:[#allocation2 + $0x68] sm:$0xff] %v800
    %865 = vst [vmem:[#allocation2 + $0x70] sm:$0xff] %v801
    %866 = vst [vmem:[#allocation2 + $0x78] sm:$0xff] %v802
    %867 = vst [vmem:[#allocation2 + $0x80] sm:$0xff] %v803
    %868 = vst [vmem:[#allocation2 + $0x88] sm:$0xff] %v804
    %869 = vst [vmem:[#allocation2 + $0x90] sm:$0xff] %v805
    %870 = vst [vmem:[#allocation2 + $0x98] sm:$0xff] %v806
    %871 = vst [vmem:[#allocation2 + $0xa0] sm:$0xff] %v807
    %872 = vst [vmem:[#allocation2 + $0xa8] sm:$0xff] %v808
    %873 = vst [vmem:[#allocation2 + $0xb0] sm:$0xff] %v809
    %874 = vst [vmem:[#allocation2 + $0xb8] sm:$0xff] %v810
    %875 = vst [vmem:[#allocation2 + $0xc0] sm:$0xff] %v811
    %876 = vst [vmem:[#allocation2 + $0xc8] sm:$0xff] %v812
    %877 = vst [vmem:[#allocation2 + $0xd0] sm:$0xff] %v813
    %878 = vst [vmem:[#allocation2 + $0xd8] sm:$0xff] %v814
    %879 = vst [vmem:[#allocation2 + $0xe0] sm:$0xff] %v815
    %880 = vst [vmem:[#allocation2 + $0xe8] sm:$0xff] %v816
    %881 = vst [vmem:[#allocation2 + $0xf0] sm:$0xff] %v817
    %882 = vst [vmem:[#allocation2 + $0xf8] sm:$0xff] %v818
    %883 = vst [vmem:[#allocation2 + $0x100] sm:$0xff] %v819
    %884 = vst [vmem:[#allocation2 + $0x108] sm:$0xff] %v820
    %885 = vst [vmem:[#allocation2 + $0x110] sm:$0xff] %v821
    %886 = vst [vmem:[#allocation2 + $0x118] sm:$0xff] %v822
    %887 = vst [vmem:[#allocation2 + $0x120] sm:$0xff] %v823
    %888 = vst [vmem:[#allocation2 + $0x128] sm:$0xff] %v824
    %889 = vst [vmem:[#allocation2 + $0x130] sm:$0xff] %v825
    %890 = vst [vmem:[#allocation2 + $0x138] sm:$0xff] %v826
    %891 = vst [vmem:[#allocation2 + $0x140] sm:$0xff] %v827
    %892 = vst [vmem:[#allocation2 + $0x148] sm:$0xff] %v828
    %893 = vst [vmem:[#allocation2 + $0x150] sm:$0xff] %v829
    %894 = vst [vmem:[#allocation2 + $0x158] sm:$0xff] %v830
    %895 = vst [vmem:[#allocation2 + $0x160] sm:$0xff] %v831
    %896 = vst [vmem:[#allocation2 + $0x168] sm:$0xff] %v832
    %897 = vst [vmem:[#allocation2 + $0x170] sm:$0xff] %v833
    %898 = vst [vmem:[#allocation2 + $0x178] sm:$0xff] %v834
    %899 = vst [vmem:[#allocation2 + $0x180] sm:$0xff] %v835
    %900 = vst [vmem:[#allocation2 + $0x188] sm:$0xff] %v836
    %901 = vst [vmem:[#allocation2 + $0x190] sm:$0xff] %v837
    %902 = vst [vmem:[#allocation2 + $0x198] sm:$0xff] %v838
    %903 = vst [vmem:[#allocation2 + $0x1a0] sm:$0xff] %v839
    %904 = vst [vmem:[#allocation2 + $0x1a8] sm:$0xff] %v840
    %905 = vst [vmem:[#allocation2 + $0x1b0] sm:$0xff] %v841
    %906 = vst [vmem:[#allocation2 + $0x1b8] sm:$0xff] %v842
    %907 = vst [vmem:[#allocation2 + $0x1c0] sm:$0xff] %v843
    %908 = vst [vmem:[#allocation2 + $0x1c8] sm:$0xff] %v844
    %909 = vst [vmem:[#allocation2 + $0x1d0] sm:$0xff] %v845
    %910 = vst [vmem:[#allocation2 + $0x1d8] sm:$0xff] %v846
    %911 = vst [vmem:[#allocation2 + $0x1e0] sm:$0xff] %v847
    %912 = vst [vmem:[#allocation2 + $0x1e8] sm:$0xff] %v848
    %913 = vst [vmem:[#allocation2 + $0x1f0] sm:$0xff] %v849
    %914 = vst [vmem:[#allocation2 + $0x1f8] sm:$0xff] %v850
    // Predicated region
    $region18: #{tpu_custom_call.1} parent=1 // pred_check
      _
    $region19: #{tpu_custom_call.1} parent=1 // pred_check_branch
      %916 = sbr.rel (0) target = $region21
    $region20: #{tpu_custom_call.1} parent=1 // pred_region
      %s918 = ssub.s32 8192, 8192
      %919 = vsyncadd [#allocation3], %s918
      %s920 = sshll.u32 [#allocation2], 4
      %s921 = int_to_ptr.vmem [resolvable:$true] %s920
      %926 = dma.vmem_to_hbm [thread:$0]  %s921, 8192, %s4, [#allocation3], 128, 128, 8
    $region21: #{tpu_custom_call.1} parent=1 // pred_fallthru
      _
    // Predicated region
    $region22: #{tpu_custom_call.1} parent=1 // pred_check
      _
    $region23: #{tpu_custom_call.1} parent=1 // pred_check_branch
      %928 = sbr.rel (0) target = $region25
    $region24: #{tpu_custom_call.1} parent=1 // pred_region
      %929 = dma.done [#allocation3], 8192
    $region25: #{tpu_custom_call.1} parent=1 // pred_fallthru
      _
    %930 = vsyncpa [#allocation3], 1

</llo_original>
